<compile_context>
chip_gen: v7x
topology: tpu7x:2x2x1
jax: 0.10.0
libtpu: 0.0.40
codegen_flags: <defaults>
</compile_context>

<pallas_src>
import math

import jax
import jax.numpy as jnp
from jax.experimental import pallas as pl
from jax.experimental.pallas import tpu as pltpu

_LANES = 128
_NEG_INF = -1e30   # lane-padding bias for the final Linear -> exp underflows to exactly 0


# -----------------------------------------------------------------------------
# Fused kernel: Conv2d(C,1,3,p=1) -> GlobalAvgPool -> MLP(1->64->32->4) -> Softmax
# for SB packed groups of TB lane-packed images per grid step.
# -----------------------------------------------------------------------------
def _crowd_density_kernel(x_ref, cw_ref, cb_ref,
                          w1_ref, b1_ref, w2_ref, b2_ref, w3_ref, b3_ref,
                          dmap_ref, cls_ref):
    # x_ref    : (SB, C, H, L) VMEM, L = TB*W (TB images packed back-to-back along lanes)
    # cw_ref   : (C*9,)  SMEM  — conv weights, index = c*9 + ki*3 + kj
    # cb_ref   : (1,)    SMEM  — conv bias
    # w1 (1,64) b1 (1,64) w2 (64,32) b2 (1,32) w3 (32,128) b3 (1,128)   VMEM (w3/b3 lane-padded)
    # dmap_ref : (SB, H, L)    VMEM out — density maps, lane-packed like x
    # cls_ref  : (SB, TB, 128) VMEM out — softmax probs in lanes [0, 4), zeros elsewhere
    SB, C, H, L = x_ref.shape
    TB = cls_ref.shape[1]
    W = L // TB

    # ---- compile-time-constant boundary masks (built once, hoisted out of all loops) ----
    row = jax.lax.broadcasted_iota(jnp.int32, (H, L), 0)
    lane = jax.lax.broadcasted_iota(jnp.int32, (H, L), 1)
    # column index within each packed image
    jcol = jnp.bitwise_and(lane, W - 1) if (W & (W - 1)) == 0 else lane % W
    valid_up = row >= 1          # tap (i-1, j) exists
    valid_dn = row <= H - 2      # tap (i+1, j) exists
    valid_lt = jcol >= 1         # tap (i, j-1) exists (also blocks leakage across images)
    valid_rt = jcol <= W - 2     # tap (i, j+1) exists

    # per-image lane-segment indicator for the pooling reduction
    b_ids = jax.lax.broadcasted_iota(jnp.int32, (TB, L), 0)
    l_ids = jax.lax.broadcasted_iota(jnp.int32, (TB, L), 1)
    seg = jnp.logical_and(l_ids >= b_ids * W, l_ids < b_ids * W + W).astype(jnp.float32)

    inv_hw = 1.0 / (H * W)

    for s in range(SB):
        # ---- Conv2d(C, 1, 3, padding=1): 9 taps via XLU rolls + boundary masks ----
        acc = jnp.zeros((H, L), jnp.float32)
        for c in range(C):
            xc = x_ref[s, c].astype(jnp.float32)                               # (H, L)
            r_up = jnp.where(valid_up, pltpu.roll(xc, 1, axis=0), 0.0)         # x[i-1, j]
            r_dn = jnp.where(valid_dn, pltpu.roll(xc, H - 1, axis=0), 0.0)     # x[i+1, j]
            for ki, r in enumerate((r_up, xc, r_dn)):                          # ki = 0, 1, 2
                t_lt = jnp.where(valid_lt, pltpu.roll(r, 1, axis=1), 0.0)      # x[., j-1]
                t_rt = jnp.where(valid_rt, pltpu.roll(r, L - 1, axis=1), 0.0)  # x[., j+1]
                for kj, t in enumerate((t_lt, r, t_rt)):                       # kj = 0, 1, 2
                    acc = acc + t * cw_ref[c * 9 + ki * 3 + kj]
        dmap = acc + cb_ref[0]
        dmap_ref[s] = dmap                                                     # full 128-lane store

        # ---- fused AdaptiveAvgPool2d((1,1)) + Flatten, per packed image -> (TB, 1) ----
        colsum = jnp.sum(dmap, axis=0, keepdims=True)                          # (1, L)
        pooled = jnp.sum(seg * colsum, axis=1, keepdims=True) * inv_hw         # (TB, 1)

        # ---- MLP head, batched over the TB packed images (dropouts = identity, eval) ----
        h1 = jnp.maximum(pooled * w1_ref[...] + b1_ref[...], 0.0)              # (TB, 64)
        h2 = jnp.dot(h1, w2_ref[...], preferred_element_type=jnp.float32) + b2_ref[...]
        h2 = jnp.maximum(h2, 0.0)                                              # (TB, 32)
        logits = (jnp.dot(h2, w3_ref[...], preferred_element_type=jnp.float32)
                  + b3_ref[...])                                               # (TB, 128)

        # ---- Softmax over lane-padded logits (padded columns -> exactly 0 probability) ----
        m = jnp.max(logits, axis=-1, keepdims=True)
        e = jnp.exp(logits - m)
        denom = jnp.sum(e, axis=-1, keepdims=True)
        cls_ref[s] = e * pl.reciprocal(denom, approx=True)                     # full vreg store


# -----------------------------------------------------------------------------
# Wrapper: lane-dense packing / un-packing + pallas_call
# -----------------------------------------------------------------------------
def crowd_density_classifier_forward(x, params, *, tb=None, sb=None):
    """x: [B, C, H, W] f32 -> (density_map [B,1,H,W], crowd_level [B,4])."""
    B, C, H, W = x.shape

    # TB images packed along the 128-lane axis; SB packed groups per grid step.
    if tb is None:
        tb = max(1, _LANES // W)
    if sb is None:
        # keep >=2 grid steps at realistic batch sizes (v7x: two TensorCores), cap step size
        sb = max(1, min(8, B // (2 * tb)))
    group = sb * tb
    n_steps = pl.cdiv(B, group)
    B_pad = n_steps * group
    nb = n_steps * sb
    L = tb * W

    xp = x if B_pad == B else jnp.pad(x, ((0, B_pad - B), (0, 0), (0, 0), (0, 0)))
    # (B_pad, C, H, W) -> (nb, tb, C, H, W) -> (nb, C, H, tb, W) -> (nb, C, H, tb*W)
    xp = xp.reshape(nb, tb, C, H, W).transpose(0, 2, 3, 1, 4).reshape(nb, C, H, L)

    # lane-pad the final Linear(32, 4): zero weights, -1e30 biases in columns >= 4
    ncls = params["w3"].shape[1]
    w3p = jnp.pad(params["w3"], ((0, 0), (0, _LANES - ncls)))
    b3p = jnp.pad(params["b3"], ((0, 0), (0, _LANES - ncls)), constant_values=_NEG_INF)

    vmem = pl.BlockSpec(memory_space=pltpu.MemorySpace.VMEM)
    smem = pl.BlockSpec(memory_space=pltpu.MemorySpace.SMEM)

    dmap_p, cls_p = pl.pallas_call(
        _crowd_density_kernel,
        out_shape=(jax.ShapeDtypeStruct((nb, H, L), jnp.float32),
                   jax.ShapeDtypeStruct((nb, tb, _LANES), jnp.float32)),
        grid=(n_steps,),
        in_specs=[
            pl.BlockSpec((sb, C, H, L), lambda i: (i, 0, 0, 0)),   # x: SB packed groups/step
            smem,                                                  # conv_w_flat (C*9,)
            smem,                                                  # conv_b (1,)
            vmem, vmem,                                            # w1 (1,64), b1 (1,64)
            vmem, vmem,                                            # w2 (64,32), b2 (1,32)
            vmem, vmem,                                            # w3p (32,128), b3p (1,128)
        ],
        out_specs=(pl.BlockSpec((sb, H, L), lambda i: (i, 0, 0)),
                   pl.BlockSpec((sb, tb, _LANES), lambda i: (i, 0, 0))),
        compiler_params=pltpu.CompilerParams(dimension_semantics=("parallel",)),
    )(xp, params["conv_w_flat"], params["conv_b"],
      params["w1"], params["b1"], params["w2"], params["b2"], w3p, b3p)

    # un-pack (pure layout plumbing in the wrapper)
    dmap = (dmap_p.reshape(nb, H, tb, W)
            .transpose(0, 2, 1, 3)
            .reshape(B_pad, 1, H, W)[:B])
    crowd = cls_p[:, :, :ncls].reshape(B_pad, ncls)[:B]
    return dmap, crowd


# -----------------------------------------------------------------------------
# Deterministic parameter init (PyTorch-default-style uniform bounds)
# -----------------------------------------------------------------------------
def init_params(key, c_in):
    ks = jax.random.split(key, 8)

    def unif(k, shape, fan_in):
        bound = 1.0 / math.sqrt(fan_in)
        return jax.random.uniform(k, shape, jnp.float32, -bound, bound)

    conv_w = unif(ks[0], (1, c_in, 3, 3), c_in * 9)
    conv_b = unif(ks[1], (1,), c_in * 9)
    return {
        "conv_w_flat": conv_w.reshape(-1),          # (C*9,), index = c*9 + ki*3 + kj
        "conv_b": conv_b,                           # (1,)
        "w1": unif(ks[2], (1, 64), 1),              # Linear(1, 64)
        "b1": unif(ks[3], (1, 64), 1),
        "w2": unif(ks[4], (64, 32), 64),            # Linear(64, 32)
        "b2": unif(ks[5], (1, 32), 64),
        "w3": unif(ks[6], (32, 4), 32),             # Linear(32, 4)
        "b3": unif(ks[7], (1, 4), 32),
    }


# -----------------------------------------------------------------------------
# Pure-JAX reference (for correctness check)
# -----------------------------------------------------------------------------
def _reference_forward(x, params):
    B, C, H, W = x.shape
    conv_w = params["conv_w_flat"].reshape(1, C, 3, 3)
    dmap = jax.lax.conv_general_dilated(
        x, conv_w, window_strides=(1, 1), padding=((1, 1), (1, 1)),
        dimension_numbers=("NCHW", "OIHW", "NCHW"),
        precision=jax.lax.Precision.HIGHEST) + params["conv_b"].reshape(1, 1, 1, 1)
    pooled = jnp.mean(dmap, axis=(2, 3))                                        # (B, 1)
    h1 = jax.nn.relu(jnp.dot(pooled, params["w1"], precision="highest") + params["b1"])
    h2 = jax.nn.relu(jnp.dot(h1, params["w2"], precision="highest") + params["b2"])
    logits = jnp.dot(h2, params["w3"], precision="highest") + params["b3"]
    return dmap, jax.nn.softmax(logits, axis=1)


if __name__ == "__main__":
    B, C, H, W = 2, 4, 16, 16
    key = jax.random.PRNGKey(0)
    x = jax.random.normal(key, (B, C, H, W), jnp.float32)
    params = init_params(jax.random.PRNGKey(42), C)

    fwd = jax.jit(crowd_density_classifier_forward)
    density_map, crowd_level = fwd(x, params)
    jax.block_until_ready((density_map, crowd_level))

    assert density_map.shape == (B, 1, H, W)
    assert crowd_level.shape == (B, 4)

    ref_dmap, ref_crowd = _reference_forward(x, params)
    assert jnp.allclose(density_map, ref_dmap, atol=1e-4, rtol=1e-4), "density map mismatch"
    # approx=True reciprocal in the softmax denominator -> slightly looser tolerance
    assert jnp.allclose(crowd_level, ref_crowd, atol=1e-2, rtol=1e-2), "crowd level mismatch"
    assert jnp.allclose(jnp.sum(crowd_level, axis=1), 1.0, atol=1e-2)
    print("KERNEL_OK")
</pallas_src>

<mosaic_0001>
module attributes {stable_mosaic.version = 11 : i64} {
  func.func @_crowd_density_kernel(%arg0: i32, %arg1: memref<1x4x16x128xf32, #tpu.memory_space<vmem>>, %arg2: memref<36xf32, #tpu.memory_space<smem>>, %arg3: memref<1xf32, #tpu.memory_space<smem>>, %arg4: memref<1x64xf32, #tpu.memory_space<vmem>>, %arg5: memref<1x64xf32, #tpu.memory_space<vmem>>, %arg6: memref<64x32xf32, #tpu.memory_space<vmem>>, %arg7: memref<1x32xf32, #tpu.memory_space<vmem>>, %arg8: memref<32x128xf32, #tpu.memory_space<vmem>>, %arg9: memref<1x128xf32, #tpu.memory_space<vmem>>, %arg10: memref<1x16x128xf32, #tpu.memory_space<vmem>>, %arg11: memref<1x8x128xf32, #tpu.memory_space<vmem>>) attributes {dimension_semantics = [#tpu.dimension_semantics<parallel>], iteration_bounds = array<i64: 1>, scalar_prefetch = 0 : i64, scratch_operands = 0 : i64, tpu.core_type = #tpu.core_type<tc>, window_params = [{transform_indices = @transform_0, window_bounds = array<i64: 1, 4, 16, 128>}, {transform_indices = @transform_1, window_bounds = array<i64: 36>}, {transform_indices = @transform_2, window_bounds = array<i64: 1>}, {pipeline_mode = #tpu.pipeline_mode<synchronous>, transform_indices = @transform_3, window_bounds = array<i64: 1, 64>}, {pipeline_mode = #tpu.pipeline_mode<synchronous>, transform_indices = @transform_4, window_bounds = array<i64: 1, 64>}, {pipeline_mode = #tpu.pipeline_mode<synchronous>, transform_indices = @transform_5, window_bounds = array<i64: 64, 32>}, {pipeline_mode = #tpu.pipeline_mode<synchronous>, transform_indices = @transform_6, window_bounds = array<i64: 1, 32>}, {pipeline_mode = #tpu.pipeline_mode<synchronous>, transform_indices = @transform_7, window_bounds = array<i64: 32, 128>}, {pipeline_mode = #tpu.pipeline_mode<synchronous>, transform_indices = @transform_8, window_bounds = array<i64: 1, 128>}, {transform_indices = @transform_9, window_bounds = array<i64: 1, 16, 128>}, {transform_indices = @transform_10, window_bounds = array<i64: 1, 8, 128>}]} {
    %0 = tpu.iota {dimensions = array<i32: 0>} : vector<16x128xi32>
    %1 = tpu.iota {dimensions = array<i32: 1>} : vector<16x128xi32>
    %c15_i32 = arith.constant 15 : i32
    %2 = vector.broadcast %c15_i32 : i32 to vector<16x128xi32>
    %3 = arith.andi %1, %2 : vector<16x128xi32>
    %c1_i32 = arith.constant 1 : i32
    %4 = vector.broadcast %c1_i32 : i32 to vector<16x128xi32>
    %5 = arith.cmpi sge, %0, %4 : vector<16x128xi32>
    %c14_i32 = arith.constant 14 : i32
    %6 = vector.broadcast %c14_i32 : i32 to vector<16x128xi32>
    %7 = arith.cmpi sle, %0, %6 : vector<16x128xi32>
    %c1_i32_0 = arith.constant 1 : i32
    %8 = vector.broadcast %c1_i32_0 : i32 to vector<16x128xi32>
    %9 = arith.cmpi sge, %3, %8 : vector<16x128xi32>
    %c14_i32_1 = arith.constant 14 : i32
    %10 = vector.broadcast %c14_i32_1 : i32 to vector<16x128xi32>
    %11 = arith.cmpi sle, %3, %10 : vector<16x128xi32>
    %12 = tpu.iota {dimensions = array<i32: 0>} : vector<8x128xi32>
    %13 = tpu.iota {dimensions = array<i32: 1>} : vector<8x128xi32>
    %c16_i32 = arith.constant 16 : i32
    %14 = vector.broadcast %c16_i32 : i32 to vector<8x128xi32>
    %15 = arith.muli %12, %14 : vector<8x128xi32>
    %16 = arith.cmpi sge, %13, %15 : vector<8x128xi32>
    %c16_i32_2 = arith.constant 16 : i32
    %17 = vector.broadcast %c16_i32_2 : i32 to vector<8x128xi32>
    %18 = arith.muli %12, %17 : vector<8x128xi32>
    %c16_i32_3 = arith.constant 16 : i32
    %19 = vector.broadcast %c16_i32_3 : i32 to vector<8x128xi32>
    %20 = arith.addi %18, %19 : vector<8x128xi32>
    %21 = arith.cmpi slt, %13, %20 : vector<8x128xi32>
    %22 = arith.andi %16, %21 : vector<8x128xi1>
    %23 = arith.extui %22 : vector<8x128xi1> to vector<8x128xi32>
    %24 = arith.sitofp %23 : vector<8x128xi32> to vector<8x128xf32>
    %cst = arith.constant 0.000000e+00 : f32
    %25 = vector.broadcast %cst : f32 to vector<16x128xf32>
    %c0 = arith.constant 0 : index
    %c0_4 = arith.constant 0 : index
    %c0_5 = arith.constant 0 : index
    %c0_6 = arith.constant 0 : index
    %26 = vector.load %arg1[%c0, %c0_4, %c0_5, %c0_6] : memref<1x4x16x128xf32, #tpu.memory_space<vmem>>, vector<1x1x16x128xf32>
    %27 = vector.shape_cast %26 : vector<1x1x16x128xf32> to vector<16x128xf32>
    %c1_i32_7 = arith.constant 1 : i32
    %28 = tpu.dynamic_rotate %27 by %c1_i32_7 dim 0 : vector<16x128xf32>, i32 -> vector<16x128xf32>
    %cst_8 = arith.constant 0.000000e+00 : f32
    %29 = vector.broadcast %cst_8 : f32 to vector<16x128xf32>
    %30 = arith.select %5, %28, %29 : vector<16x128xi1>, vector<16x128xf32>
    %c15_i32_9 = arith.constant 15 : i32
    %31 = tpu.dynamic_rotate %27 by %c15_i32_9 dim 0 : vector<16x128xf32>, i32 -> vector<16x128xf32>
    %cst_10 = arith.constant 0.000000e+00 : f32
    %32 = vector.broadcast %cst_10 : f32 to vector<16x128xf32>
    %33 = arith.select %7, %31, %32 : vector<16x128xi1>, vector<16x128xf32>
    %c1_i32_11 = arith.constant 1 : i32
    %34 = tpu.dynamic_rotate %30 by %c1_i32_11 dim 1 : vector<16x128xf32>, i32 -> vector<16x128xf32>
    %cst_12 = arith.constant 0.000000e+00 : f32
    %35 = vector.broadcast %cst_12 : f32 to vector<16x128xf32>
    %36 = arith.select %9, %34, %35 : vector<16x128xi1>, vector<16x128xf32>
    %c127_i32 = arith.constant 127 : i32
    %37 = tpu.dynamic_rotate %30 by %c127_i32 dim 1 : vector<16x128xf32>, i32 -> vector<16x128xf32>
    %cst_13 = arith.constant 0.000000e+00 : f32
    %38 = vector.broadcast %cst_13 : f32 to vector<16x128xf32>
    %39 = arith.select %11, %37, %38 : vector<16x128xi1>, vector<16x128xf32>
    %c0_14 = arith.constant 0 : index
    %40 = memref.load %arg2[%c0_14] : memref<36xf32, #tpu.memory_space<smem>>
    %41 = vector.broadcast %40 : f32 to vector<16x128xf32>
    %42 = arith.mulf %36, %41 : vector<16x128xf32>
    %43 = arith.addf %25, %42 : vector<16x128xf32>
    %c1 = arith.constant 1 : index
    %44 = memref.load %arg2[%c1] : memref<36xf32, #tpu.memory_space<smem>>
    %45 = vector.broadcast %44 : f32 to vector<16x128xf32>
    %46 = arith.mulf %30, %45 : vector<16x128xf32>
    %47 = arith.addf %43, %46 : vector<16x128xf32>
    %c2 = arith.constant 2 : index
    %48 = memref.load %arg2[%c2] : memref<36xf32, #tpu.memory_space<smem>>
    %49 = vector.broadcast %48 : f32 to vector<16x128xf32>
    %50 = arith.mulf %39, %49 : vector<16x128xf32>
    %51 = arith.addf %47, %50 : vector<16x128xf32>
    %c1_i32_15 = arith.constant 1 : i32
    %52 = tpu.dynamic_rotate %27 by %c1_i32_15 dim 1 : vector<16x128xf32>, i32 -> vector<16x128xf32>
    %cst_16 = arith.constant 0.000000e+00 : f32
    %53 = vector.broadcast %cst_16 : f32 to vector<16x128xf32>
    %54 = arith.select %9, %52, %53 : vector<16x128xi1>, vector<16x128xf32>
    %c127_i32_17 = arith.constant 127 : i32
    %55 = tpu.dynamic_rotate %27 by %c127_i32_17 dim 1 : vector<16x128xf32>, i32 -> vector<16x128xf32>
    %cst_18 = arith.constant 0.000000e+00 : f32
    %56 = vector.broadcast %cst_18 : f32 to vector<16x128xf32>
    %57 = arith.select %11, %55, %56 : vector<16x128xi1>, vector<16x128xf32>
    %c3 = arith.constant 3 : index
    %58 = memref.load %arg2[%c3] : memref<36xf32, #tpu.memory_space<smem>>
    %59 = vector.broadcast %58 : f32 to vector<16x128xf32>
    %60 = arith.mulf %54, %59 : vector<16x128xf32>
    %61 = arith.addf %51, %60 : vector<16x128xf32>
    %c4 = arith.constant 4 : index
    %62 = memref.load %arg2[%c4] : memref<36xf32, #tpu.memory_space<smem>>
    %63 = vector.broadcast %62 : f32 to vector<16x128xf32>
    %64 = arith.mulf %27, %63 : vector<16x128xf32>
    %65 = arith.addf %61, %64 : vector<16x128xf32>
    %c5 = arith.constant 5 : index
    %66 = memref.load %arg2[%c5] : memref<36xf32, #tpu.memory_space<smem>>
    %67 = vector.broadcast %66 : f32 to vector<16x128xf32>
    %68 = arith.mulf %57, %67 : vector<16x128xf32>
    %69 = arith.addf %65, %68 : vector<16x128xf32>
    %c1_i32_19 = arith.constant 1 : i32
    %70 = tpu.dynamic_rotate %33 by %c1_i32_19 dim 1 : vector<16x128xf32>, i32 -> vector<16x128xf32>
    %cst_20 = arith.constant 0.000000e+00 : f32
    %71 = vector.broadcast %cst_20 : f32 to vector<16x128xf32>
    %72 = arith.select %9, %70, %71 : vector<16x128xi1>, vector<16x128xf32>
    %c127_i32_21 = arith.constant 127 : i32
    %73 = tpu.dynamic_rotate %33 by %c127_i32_21 dim 1 : vector<16x128xf32>, i32 -> vector<16x128xf32>
    %cst_22 = arith.constant 0.000000e+00 : f32
    %74 = vector.broadcast %cst_22 : f32 to vector<16x128xf32>
    %75 = arith.select %11, %73, %74 : vector<16x128xi1>, vector<16x128xf32>
    %c6 = arith.constant 6 : index
    %76 = memref.load %arg2[%c6] : memref<36xf32, #tpu.memory_space<smem>>
    %77 = vector.broadcast %76 : f32 to vector<16x128xf32>
    %78 = arith.mulf %72, %77 : vector<16x128xf32>
    %79 = arith.addf %69, %78 : vector<16x128xf32>
    %c7 = arith.constant 7 : index
    %80 = memref.load %arg2[%c7] : memref<36xf32, #tpu.memory_space<smem>>
    %81 = vector.broadcast %80 : f32 to vector<16x128xf32>
    %82 = arith.mulf %33, %81 : vector<16x128xf32>
    %83 = arith.addf %79, %82 : vector<16x128xf32>
    %c8 = arith.constant 8 : index
    %84 = memref.load %arg2[%c8] : memref<36xf32, #tpu.memory_space<smem>>
    %85 = vector.broadcast %84 : f32 to vector<16x128xf32>
    %86 = arith.mulf %75, %85 : vector<16x128xf32>
    %87 = arith.addf %83, %86 : vector<16x128xf32>
    %c0_23 = arith.constant 0 : index
    %c1_24 = arith.constant 1 : index
    %c0_25 = arith.constant 0 : index
    %c0_26 = arith.constant 0 : index
    %88 = vector.load %arg1[%c0_23, %c1_24, %c0_25, %c0_26] : memref<1x4x16x128xf32, #tpu.memory_space<vmem>>, vector<1x1x16x128xf32>
    %89 = vector.shape_cast %88 : vector<1x1x16x128xf32> to vector<16x128xf32>
    %c1_i32_27 = arith.constant 1 : i32
    %90 = tpu.dynamic_rotate %89 by %c1_i32_27 dim 0 : vector<16x128xf32>, i32 -> vector<16x128xf32>
    %cst_28 = arith.constant 0.000000e+00 : f32
    %91 = vector.broadcast %cst_28 : f32 to vector<16x128xf32>
    %92 = arith.select %5, %90, %91 : vector<16x128xi1>, vector<16x128xf32>
    %c15_i32_29 = arith.constant 15 : i32
    %93 = tpu.dynamic_rotate %89 by %c15_i32_29 dim 0 : vector<16x128xf32>, i32 -> vector<16x128xf32>
    %cst_30 = arith.constant 0.000000e+00 : f32
    %94 = vector.broadcast %cst_30 : f32 to vector<16x128xf32>
    %95 = arith.select %7, %93, %94 : vector<16x128xi1>, vector<16x128xf32>
    %c1_i32_31 = arith.constant 1 : i32
    %96 = tpu.dynamic_rotate %92 by %c1_i32_31 dim 1 : vector<16x128xf32>, i32 -> vector<16x128xf32>
    %cst_32 = arith.constant 0.000000e+00 : f32
    %97 = vector.broadcast %cst_32 : f32 to vector<16x128xf32>
    %98 = arith.select %9, %96, %97 : vector<16x128xi1>, vector<16x128xf32>
    %c127_i32_33 = arith.constant 127 : i32
    %99 = tpu.dynamic_rotate %92 by %c127_i32_33 dim 1 : vector<16x128xf32>, i32 -> vector<16x128xf32>
    %cst_34 = arith.constant 0.000000e+00 : f32
    %100 = vector.broadcast %cst_34 : f32 to vector<16x128xf32>
    %101 = arith.select %11, %99, %100 : vector<16x128xi1>, vector<16x128xf32>
    %c9 = arith.constant 9 : index
    %102 = memref.load %arg2[%c9] : memref<36xf32, #tpu.memory_space<smem>>
    %103 = vector.broadcast %102 : f32 to vector<16x128xf32>
    %104 = arith.mulf %98, %103 : vector<16x128xf32>
    %105 = arith.addf %87, %104 : vector<16x128xf32>
    %c10 = arith.constant 10 : index
    %106 = memref.load %arg2[%c10] : memref<36xf32, #tpu.memory_space<smem>>
    %107 = vector.broadcast %106 : f32 to vector<16x128xf32>
    %108 = arith.mulf %92, %107 : vector<16x128xf32>
    %109 = arith.addf %105, %108 : vector<16x128xf32>
    %c11 = arith.constant 11 : index
    %110 = memref.load %arg2[%c11] : memref<36xf32, #tpu.memory_space<smem>>
    %111 = vector.broadcast %110 : f32 to vector<16x128xf32>
    %112 = arith.mulf %101, %111 : vector<16x128xf32>
    %113 = arith.addf %109, %112 : vector<16x128xf32>
    %c1_i32_35 = arith.constant 1 : i32
    %114 = tpu.dynamic_rotate %89 by %c1_i32_35 dim 1 : vector<16x128xf32>, i32 -> vector<16x128xf32>
    %cst_36 = arith.constant 0.000000e+00 : f32
    %115 = vector.broadcast %cst_36 : f32 to vector<16x128xf32>
    %116 = arith.select %9, %114, %115 : vector<16x128xi1>, vector<16x128xf32>
    %c127_i32_37 = arith.constant 127 : i32
    %117 = tpu.dynamic_rotate %89 by %c127_i32_37 dim 1 : vector<16x128xf32>, i32 -> vector<16x128xf32>
    %cst_38 = arith.constant 0.000000e+00 : f32
    %118 = vector.broadcast %cst_38 : f32 to vector<16x128xf32>
    %119 = arith.select %11, %117, %118 : vector<16x128xi1>, vector<16x128xf32>
    %c12 = arith.constant 12 : index
    %120 = memref.load %arg2[%c12] : memref<36xf32, #tpu.memory_space<smem>>
    %121 = vector.broadcast %120 : f32 to vector<16x128xf32>
    %122 = arith.mulf %116, %121 : vector<16x128xf32>
    %123 = arith.addf %113, %122 : vector<16x128xf32>
    %c13 = arith.constant 13 : index
    %124 = memref.load %arg2[%c13] : memref<36xf32, #tpu.memory_space<smem>>
    %125 = vector.broadcast %124 : f32 to vector<16x128xf32>
    %126 = arith.mulf %89, %125 : vector<16x128xf32>
    %127 = arith.addf %123, %126 : vector<16x128xf32>
    %c14 = arith.constant 14 : index
    %128 = memref.load %arg2[%c14] : memref<36xf32, #tpu.memory_space<smem>>
    %129 = vector.broadcast %128 : f32 to vector<16x128xf32>
    %130 = arith.mulf %119, %129 : vector<16x128xf32>
    %131 = arith.addf %127, %130 : vector<16x128xf32>
    %c1_i32_39 = arith.constant 1 : i32
    %132 = tpu.dynamic_rotate %95 by %c1_i32_39 dim 1 : vector<16x128xf32>, i32 -> vector<16x128xf32>
    %cst_40 = arith.constant 0.000000e+00 : f32
    %133 = vector.broadcast %cst_40 : f32 to vector<16x128xf32>
    %134 = arith.select %9, %132, %133 : vector<16x128xi1>, vector<16x128xf32>
    %c127_i32_41 = arith.constant 127 : i32
    %135 = tpu.dynamic_rotate %95 by %c127_i32_41 dim 1 : vector<16x128xf32>, i32 -> vector<16x128xf32>
    %cst_42 = arith.constant 0.000000e+00 : f32
    %136 = vector.broadcast %cst_42 : f32 to vector<16x128xf32>
    %137 = arith.select %11, %135, %136 : vector<16x128xi1>, vector<16x128xf32>
    %c15 = arith.constant 15 : index
    %138 = memref.load %arg2[%c15] : memref<36xf32, #tpu.memory_space<smem>>
    %139 = vector.broadcast %138 : f32 to vector<16x128xf32>
    %140 = arith.mulf %134, %139 : vector<16x128xf32>
    %141 = arith.addf %131, %140 : vector<16x128xf32>
    %c16 = arith.constant 16 : index
    %142 = memref.load %arg2[%c16] : memref<36xf32, #tpu.memory_space<smem>>
    %143 = vector.broadcast %142 : f32 to vector<16x128xf32>
    %144 = arith.mulf %95, %143 : vector<16x128xf32>
    %145 = arith.addf %141, %144 : vector<16x128xf32>
    %c17 = arith.constant 17 : index
    %146 = memref.load %arg2[%c17] : memref<36xf32, #tpu.memory_space<smem>>
    %147 = vector.broadcast %146 : f32 to vector<16x128xf32>
    %148 = arith.mulf %137, %147 : vector<16x128xf32>
    %149 = arith.addf %145, %148 : vector<16x128xf32>
    %c0_43 = arith.constant 0 : index
    %c2_44 = arith.constant 2 : index
    %c0_45 = arith.constant 0 : index
    %c0_46 = arith.constant 0 : index
    %150 = vector.load %arg1[%c0_43, %c2_44, %c0_45, %c0_46] : memref<1x4x16x128xf32, #tpu.memory_space<vmem>>, vector<1x1x16x128xf32>
    %151 = vector.shape_cast %150 : vector<1x1x16x128xf32> to vector<16x128xf32>
    %c1_i32_47 = arith.constant 1 : i32
    %152 = tpu.dynamic_rotate %151 by %c1_i32_47 dim 0 : vector<16x128xf32>, i32 -> vector<16x128xf32>
    %cst_48 = arith.constant 0.000000e+00 : f32
    %153 = vector.broadcast %cst_48 : f32 to vector<16x128xf32>
    %154 = arith.select %5, %152, %153 : vector<16x128xi1>, vector<16x128xf32>
    %c15_i32_49 = arith.constant 15 : i32
    %155 = tpu.dynamic_rotate %151 by %c15_i32_49 dim 0 : vector<16x128xf32>, i32 -> vector<16x128xf32>
    %cst_50 = arith.constant 0.000000e+00 : f32
    %156 = vector.broadcast %cst_50 : f32 to vector<16x128xf32>
    %157 = arith.select %7, %155, %156 : vector<16x128xi1>, vector<16x128xf32>
    %c1_i32_51 = arith.constant 1 : i32
    %158 = tpu.dynamic_rotate %154 by %c1_i32_51 dim 1 : vector<16x128xf32>, i32 -> vector<16x128xf32>
    %cst_52 = arith.constant 0.000000e+00 : f32
    %159 = vector.broadcast %cst_52 : f32 to vector<16x128xf32>
    %160 = arith.select %9, %158, %159 : vector<16x128xi1>, vector<16x128xf32>
    %c127_i32_53 = arith.constant 127 : i32
    %161 = tpu.dynamic_rotate %154 by %c127_i32_53 dim 1 : vector<16x128xf32>, i32 -> vector<16x128xf32>
    %cst_54 = arith.constant 0.000000e+00 : f32
    %162 = vector.broadcast %cst_54 : f32 to vector<16x128xf32>
    %163 = arith.select %11, %161, %162 : vector<16x128xi1>, vector<16x128xf32>
    %c18 = arith.constant 18 : index
    %164 = memref.load %arg2[%c18] : memref<36xf32, #tpu.memory_space<smem>>
    %165 = vector.broadcast %164 : f32 to vector<16x128xf32>
    %166 = arith.mulf %160, %165 : vector<16x128xf32>
    %167 = arith.addf %149, %166 : vector<16x128xf32>
    %c19 = arith.constant 19 : index
    %168 = memref.load %arg2[%c19] : memref<36xf32, #tpu.memory_space<smem>>
    %169 = vector.broadcast %168 : f32 to vector<16x128xf32>
    %170 = arith.mulf %154, %169 : vector<16x128xf32>
    %171 = arith.addf %167, %170 : vector<16x128xf32>
    %c20 = arith.constant 20 : index
    %172 = memref.load %arg2[%c20] : memref<36xf32, #tpu.memory_space<smem>>
    %173 = vector.broadcast %172 : f32 to vector<16x128xf32>
    %174 = arith.mulf %163, %173 : vector<16x128xf32>
    %175 = arith.addf %171, %174 : vector<16x128xf32>
    %c1_i32_55 = arith.constant 1 : i32
    %176 = tpu.dynamic_rotate %151 by %c1_i32_55 dim 1 : vector<16x128xf32>, i32 -> vector<16x128xf32>
    %cst_56 = arith.constant 0.000000e+00 : f32
    %177 = vector.broadcast %cst_56 : f32 to vector<16x128xf32>
    %178 = arith.select %9, %176, %177 : vector<16x128xi1>, vector<16x128xf32>
    %c127_i32_57 = arith.constant 127 : i32
    %179 = tpu.dynamic_rotate %151 by %c127_i32_57 dim 1 : vector<16x128xf32>, i32 -> vector<16x128xf32>
    %cst_58 = arith.constant 0.000000e+00 : f32
    %180 = vector.broadcast %cst_58 : f32 to vector<16x128xf32>
    %181 = arith.select %11, %179, %180 : vector<16x128xi1>, vector<16x128xf32>
    %c21 = arith.constant 21 : index
    %182 = memref.load %arg2[%c21] : memref<36xf32, #tpu.memory_space<smem>>
    %183 = vector.broadcast %182 : f32 to vector<16x128xf32>
    %184 = arith.mulf %178, %183 : vector<16x128xf32>
    %185 = arith.addf %175, %184 : vector<16x128xf32>
    %c22 = arith.constant 22 : index
    %186 = memref.load %arg2[%c22] : memref<36xf32, #tpu.memory_space<smem>>
    %187 = vector.broadcast %186 : f32 to vector<16x128xf32>
    %188 = arith.mulf %151, %187 : vector<16x128xf32>
    %189 = arith.addf %185, %188 : vector<16x128xf32>
    %c23 = arith.constant 23 : index
    %190 = memref.load %arg2[%c23] : memref<36xf32, #tpu.memory_space<smem>>
    %191 = vector.broadcast %190 : f32 to vector<16x128xf32>
    %192 = arith.mulf %181, %191 : vector<16x128xf32>
    %193 = arith.addf %189, %192 : vector<16x128xf32>
    %c1_i32_59 = arith.constant 1 : i32
    %194 = tpu.dynamic_rotate %157 by %c1_i32_59 dim 1 : vector<16x128xf32>, i32 -> vector<16x128xf32>
    %cst_60 = arith.constant 0.000000e+00 : f32
    %195 = vector.broadcast %cst_60 : f32 to vector<16x128xf32>
    %196 = arith.select %9, %194, %195 : vector<16x128xi1>, vector<16x128xf32>
    %c127_i32_61 = arith.constant 127 : i32
    %197 = tpu.dynamic_rotate %157 by %c127_i32_61 dim 1 : vector<16x128xf32>, i32 -> vector<16x128xf32>
    %cst_62 = arith.constant 0.000000e+00 : f32
    %198 = vector.broadcast %cst_62 : f32 to vector<16x128xf32>
    %199 = arith.select %11, %197, %198 : vector<16x128xi1>, vector<16x128xf32>
    %c24 = arith.constant 24 : index
    %200 = memref.load %arg2[%c24] : memref<36xf32, #tpu.memory_space<smem>>
    %201 = vector.broadcast %200 : f32 to vector<16x128xf32>
    %202 = arith.mulf %196, %201 : vector<16x128xf32>
    %203 = arith.addf %193, %202 : vector<16x128xf32>
    %c25 = arith.constant 25 : index
    %204 = memref.load %arg2[%c25] : memref<36xf32, #tpu.memory_space<smem>>
    %205 = vector.broadcast %204 : f32 to vector<16x128xf32>
    %206 = arith.mulf %157, %205 : vector<16x128xf32>
    %207 = arith.addf %203, %206 : vector<16x128xf32>
    %c26 = arith.constant 26 : index
    %208 = memref.load %arg2[%c26] : memref<36xf32, #tpu.memory_space<smem>>
    %209 = vector.broadcast %208 : f32 to vector<16x128xf32>
    %210 = arith.mulf %199, %209 : vector<16x128xf32>
    %211 = arith.addf %207, %210 : vector<16x128xf32>
    %c0_63 = arith.constant 0 : index
    %c3_64 = arith.constant 3 : index
    %c0_65 = arith.constant 0 : index
    %c0_66 = arith.constant 0 : index
    %212 = vector.load %arg1[%c0_63, %c3_64, %c0_65, %c0_66] : memref<1x4x16x128xf32, #tpu.memory_space<vmem>>, vector<1x1x16x128xf32>
    %213 = vector.shape_cast %212 : vector<1x1x16x128xf32> to vector<16x128xf32>
    %c1_i32_67 = arith.constant 1 : i32
    %214 = tpu.dynamic_rotate %213 by %c1_i32_67 dim 0 : vector<16x128xf32>, i32 -> vector<16x128xf32>
    %cst_68 = arith.constant 0.000000e+00 : f32
    %215 = vector.broadcast %cst_68 : f32 to vector<16x128xf32>
    %216 = arith.select %5, %214, %215 : vector<16x128xi1>, vector<16x128xf32>
    %c15_i32_69 = arith.constant 15 : i32
    %217 = tpu.dynamic_rotate %213 by %c15_i32_69 dim 0 : vector<16x128xf32>, i32 -> vector<16x128xf32>
    %cst_70 = arith.constant 0.000000e+00 : f32
    %218 = vector.broadcast %cst_70 : f32 to vector<16x128xf32>
    %219 = arith.select %7, %217, %218 : vector<16x128xi1>, vector<16x128xf32>
    %c1_i32_71 = arith.constant 1 : i32
    %220 = tpu.dynamic_rotate %216 by %c1_i32_71 dim 1 : vector<16x128xf32>, i32 -> vector<16x128xf32>
    %cst_72 = arith.constant 0.000000e+00 : f32
    %221 = vector.broadcast %cst_72 : f32 to vector<16x128xf32>
    %222 = arith.select %9, %220, %221 : vector<16x128xi1>, vector<16x128xf32>
    %c127_i32_73 = arith.constant 127 : i32
    %223 = tpu.dynamic_rotate %216 by %c127_i32_73 dim 1 : vector<16x128xf32>, i32 -> vector<16x128xf32>
    %cst_74 = arith.constant 0.000000e+00 : f32
    %224 = vector.broadcast %cst_74 : f32 to vector<16x128xf32>
    %225 = arith.select %11, %223, %224 : vector<16x128xi1>, vector<16x128xf32>
    %c27 = arith.constant 27 : index
    %226 = memref.load %arg2[%c27] : memref<36xf32, #tpu.memory_space<smem>>
    %227 = vector.broadcast %226 : f32 to vector<16x128xf32>
    %228 = arith.mulf %222, %227 : vector<16x128xf32>
    %229 = arith.addf %211, %228 : vector<16x128xf32>
    %c28 = arith.constant 28 : index
    %230 = memref.load %arg2[%c28] : memref<36xf32, #tpu.memory_space<smem>>
    %231 = vector.broadcast %230 : f32 to vector<16x128xf32>
    %232 = arith.mulf %216, %231 : vector<16x128xf32>
    %233 = arith.addf %229, %232 : vector<16x128xf32>
    %c29 = arith.constant 29 : index
    %234 = memref.load %arg2[%c29] : memref<36xf32, #tpu.memory_space<smem>>
    %235 = vector.broadcast %234 : f32 to vector<16x128xf32>
    %236 = arith.mulf %225, %235 : vector<16x128xf32>
    %237 = arith.addf %233, %236 : vector<16x128xf32>
    %c1_i32_75 = arith.constant 1 : i32
    %238 = tpu.dynamic_rotate %213 by %c1_i32_75 dim 1 : vector<16x128xf32>, i32 -> vector<16x128xf32>
    %cst_76 = arith.constant 0.000000e+00 : f32
    %239 = vector.broadcast %cst_76 : f32 to vector<16x128xf32>
    %240 = arith.select %9, %238, %239 : vector<16x128xi1>, vector<16x128xf32>
    %c127_i32_77 = arith.constant 127 : i32
    %241 = tpu.dynamic_rotate %213 by %c127_i32_77 dim 1 : vector<16x128xf32>, i32 -> vector<16x128xf32>
    %cst_78 = arith.constant 0.000000e+00 : f32
    %242 = vector.broadcast %cst_78 : f32 to vector<16x128xf32>
    %243 = arith.select %11, %241, %242 : vector<16x128xi1>, vector<16x128xf32>
    %c30 = arith.constant 30 : index
    %244 = memref.load %arg2[%c30] : memref<36xf32, #tpu.memory_space<smem>>
    %245 = vector.broadcast %244 : f32 to vector<16x128xf32>
    %246 = arith.mulf %240, %245 : vector<16x128xf32>
    %247 = arith.addf %237, %246 : vector<16x128xf32>
    %c31 = arith.constant 31 : index
    %248 = memref.load %arg2[%c31] : memref<36xf32, #tpu.memory_space<smem>>
    %249 = vector.broadcast %248 : f32 to vector<16x128xf32>
    %250 = arith.mulf %213, %249 : vector<16x128xf32>
    %251 = arith.addf %247, %250 : vector<16x128xf32>
    %c32 = arith.constant 32 : index
    %252 = memref.load %arg2[%c32] : memref<36xf32, #tpu.memory_space<smem>>
    %253 = vector.broadcast %252 : f32 to vector<16x128xf32>
    %254 = arith.mulf %243, %253 : vector<16x128xf32>
    %255 = arith.addf %251, %254 : vector<16x128xf32>
    %c1_i32_79 = arith.constant 1 : i32
    %256 = tpu.dynamic_rotate %219 by %c1_i32_79 dim 1 : vector<16x128xf32>, i32 -> vector<16x128xf32>
    %cst_80 = arith.constant 0.000000e+00 : f32
    %257 = vector.broadcast %cst_80 : f32 to vector<16x128xf32>
    %258 = arith.select %9, %256, %257 : vector<16x128xi1>, vector<16x128xf32>
    %c127_i32_81 = arith.constant 127 : i32
    %259 = tpu.dynamic_rotate %219 by %c127_i32_81 dim 1 : vector<16x128xf32>, i32 -> vector<16x128xf32>
    %cst_82 = arith.constant 0.000000e+00 : f32
    %260 = vector.broadcast %cst_82 : f32 to vector<16x128xf32>
    %261 = arith.select %11, %259, %260 : vector<16x128xi1>, vector<16x128xf32>
    %c33 = arith.constant 33 : index
    %262 = memref.load %arg2[%c33] : memref<36xf32, #tpu.memory_space<smem>>
    %263 = vector.broadcast %262 : f32 to vector<16x128xf32>
    %264 = arith.mulf %258, %263 : vector<16x128xf32>
    %265 = arith.addf %255, %264 : vector<16x128xf32>
    %c34 = arith.constant 34 : index
    %266 = memref.load %arg2[%c34] : memref<36xf32, #tpu.memory_space<smem>>
    %267 = vector.broadcast %266 : f32 to vector<16x128xf32>
    %268 = arith.mulf %219, %267 : vector<16x128xf32>
    %269 = arith.addf %265, %268 : vector<16x128xf32>
    %c35 = arith.constant 35 : index
    %270 = memref.load %arg2[%c35] : memref<36xf32, #tpu.memory_space<smem>>
    %271 = vector.broadcast %270 : f32 to vector<16x128xf32>
    %272 = arith.mulf %261, %271 : vector<16x128xf32>
    %273 = arith.addf %269, %272 : vector<16x128xf32>
    %c0_83 = arith.constant 0 : index
    %274 = memref.load %arg3[%c0_83] : memref<1xf32, #tpu.memory_space<smem>>
    %275 = vector.broadcast %274 : f32 to vector<16x128xf32>
    %276 = arith.addf %273, %275 : vector<16x128xf32>
    %c0_84 = arith.constant 0 : index
    %c0_85 = arith.constant 0 : index
    %c0_86 = arith.constant 0 : index
    %277 = vector.load %arg10[%c0_84, %c0_85, %c0_86] : memref<1x16x128xf32, #tpu.memory_space<vmem>>, vector<1x16x128xf32>
    %278 = vector.shape_cast %277 : vector<1x16x128xf32> to vector<16x128xf32>
    %279 = vector.shape_cast %276 : vector<16x128xf32> to vector<1x16x128xf32>
    tpu.vector_store %arg10[%c0_84, %c0_85, %c0_86], %279 {strides = array<i32>} : memref<1x16x128xf32, #tpu.memory_space<vmem>>, vector<1x16x128xf32>,
    %cst_87 = arith.constant dense<0.000000e+00> : vector<128xf32>
    %280 = vector.multi_reduction <add>, %276, %cst_87 [0] : vector<16x128xf32> to vector<128xf32>
    %281 = vector.shape_cast %280 : vector<128xf32> to vector<1x128xf32>
    %282 = vector.broadcast %281 : vector<1x128xf32> to vector<8x128xf32>
    %283 = arith.mulf %24, %282 : vector<8x128xf32>
    %cst_88 = arith.constant dense<0.000000e+00> : vector<8xf32>
    %284 = vector.multi_reduction <add>, %283, %cst_88 [1] : vector<8x128xf32> to vector<8xf32>
    %285 = vector.shape_cast %284 : vector<8xf32> to vector<8x1xf32>
    %cst_89 = arith.constant 3.906250e-03 : f32
    %286 = vector.broadcast %cst_89 : f32 to vector<8x1xf32>
    %287 = arith.mulf %285, %286 : vector<8x1xf32>
    %c0_90 = arith.constant 0 : index
    %c0_91 = arith.constant 0 : index
    %288 = vector.load %arg4[%c0_90, %c0_91] : memref<1x64xf32, #tpu.memory_space<vmem>>, vector<1x64xf32>
    %289 = vector.broadcast %287 : vector<8x1xf32> to vector<8x64xf32>
    %290 = vector.broadcast %288 : vector<1x64xf32> to vector<8x64xf32>
    %291 = arith.mulf %289, %290 : vector<8x64xf32>
    %c0_92 = arith.constant 0 : index
    %c0_93 = arith.constant 0 : index
    %292 = vector.load %arg5[%c0_92, %c0_93] : memref<1x64xf32, #tpu.memory_space<vmem>>, vector<1x64xf32>
    %293 = vector.broadcast %292 : vector<1x64xf32> to vector<8x64xf32>
    %294 = arith.addf %291, %293 : vector<8x64xf32>
    %cst_94 = arith.constant 0.000000e+00 : f32
    %295 = vector.broadcast %cst_94 : f32 to vector<8x64xf32>
    %296 = arith.maximumf %294, %295 : vector<8x64xf32>
    %c0_95 = arith.constant 0 : index
    %c0_96 = arith.constant 0 : index
    %297 = vector.load %arg6[%c0_95, %c0_96] : memref<64x32xf32, #tpu.memory_space<vmem>>, vector<64x32xf32>
    %cst_97 = arith.constant dense<0.000000e+00> : vector<8x32xf32>
    %298 = tpu.matmul %296, %297, %cst_97 {dimension_numbers = #tpu.dot_dimension_numbers<[1], [0], [0], [1], [0, 0, 1, 1], [], []>} : vector<8x64xf32>, vector<64x32xf32>, vector<8x32xf32> -> vector<8x32xf32>
    %c0_98 = arith.constant 0 : index
    %c0_99 = arith.constant 0 : index
    %299 = vector.load %arg7[%c0_98, %c0_99] : memref<1x32xf32, #tpu.memory_space<vmem>>, vector<1x32xf32>
    %300 = vector.broadcast %299 : vector<1x32xf32> to vector<8x32xf32>
    %301 = arith.addf %298, %300 : vector<8x32xf32>
    %cst_100 = arith.constant 0.000000e+00 : f32
    %302 = vector.broadcast %cst_100 : f32 to vector<8x32xf32>
    %303 = arith.maximumf %301, %302 : vector<8x32xf32>
    %c0_101 = arith.constant 0 : index
    %c0_102 = arith.constant 0 : index
    %304 = vector.load %arg8[%c0_101, %c0_102] : memref<32x128xf32, #tpu.memory_space<vmem>>, vector<32x128xf32>
    %cst_103 = arith.constant dense<0.000000e+00> : vector<8x128xf32>
    %305 = tpu.matmul %303, %304, %cst_103 {dimension_numbers = #tpu.dot_dimension_numbers<[1], [0], [0], [1], [0, 0, 1, 1], [], []>} : vector<8x32xf32>, vector<32x128xf32>, vector<8x128xf32> -> vector<8x128xf32>
    %c0_104 = arith.constant 0 : index
    %c0_105 = arith.constant 0 : index
    %306 = vector.load %arg9[%c0_104, %c0_105] : memref<1x128xf32, #tpu.memory_space<vmem>>, vector<1x128xf32>
    %307 = vector.broadcast %306 : vector<1x128xf32> to vector<8x128xf32>
    %308 = arith.addf %305, %307 : vector<8x128xf32>
    %cst_106 = arith.constant dense<0xFF800000> : vector<8xf32>
    %309 = vector.multi_reduction <maximumf>, %308, %cst_106 [1] : vector<8x128xf32> to vector<8xf32>
    %310 = vector.shape_cast %309 : vector<8xf32> to vector<8x1xf32>
    %311 = vector.broadcast %310 : vector<8x1xf32> to vector<8x128xf32>
    %312 = arith.subf %308, %311 : vector<8x128xf32>
    %313 = math.exp %312 : vector<8x128xf32>
    %cst_107 = arith.constant dense<0.000000e+00> : vector<8xf32>
    %314 = vector.multi_reduction <add>, %313, %cst_107 [1] : vector<8x128xf32> to vector<8xf32>
    %315 = vector.shape_cast %314 : vector<8xf32> to vector<8x1xf32>
    %316 = tpu.reciprocal %315 {approx = true} : vector<8x1xf32> -> vector<8x1xf32>
    %317 = vector.broadcast %316 : vector<8x1xf32> to vector<8x128xf32>
    %318 = arith.mulf %313, %317 : vector<8x128xf32>
    %c0_108 = arith.constant 0 : index
    %c0_109 = arith.constant 0 : index
    %c0_110 = arith.constant 0 : index
    %319 = vector.load %arg11[%c0_108, %c0_109, %c0_110] : memref<1x8x128xf32, #tpu.memory_space<vmem>>, vector<1x8x128xf32>
    %320 = vector.shape_cast %319 : vector<1x8x128xf32> to vector<8x128xf32>
    %321 = vector.shape_cast %318 : vector<8x128xf32> to vector<1x8x128xf32>
    tpu.vector_store %arg11[%c0_108, %c0_109, %c0_110], %321 {strides = array<i32>} : memref<1x8x128xf32, #tpu.memory_space<vmem>>, vector<1x8x128xf32>,
    return
  }
  func.func @transform_0(%arg0: i32) -> (i32, i32, i32, i32) {
    %c0_i32 = arith.constant 0 : i32
    %c0_i32_0 = arith.constant 0 : i32
    %c0_i32_1 = arith.constant 0 : i32
    %c0_i32_2 = arith.constant 0 : i32
    return %arg0, %c0_i32, %c0_i32_0, %c0_i32_1 : i32, i32, i32, i32
  }
  func.func @transform_1(%arg0: i32) -> i32 {
    %c0_i32 = arith.constant 0 : i32
    %c0_i32_0 = arith.constant 0 : i32
    return %c0_i32 : i32
  }
  func.func @transform_2(%arg0: i32) -> i32 {
    %c0_i32 = arith.constant 0 : i32
    %c0_i32_0 = arith.constant 0 : i32
    return %c0_i32 : i32
  }
  func.func @transform_3(%arg0: i32) -> (i32, i32) {
    %c0_i32 = arith.constant 0 : i32
    %c0_i32_0 = arith.constant 0 : i32
    %c0_i32_1 = arith.constant 0 : i32
    return %c0_i32, %c0_i32_0 : i32, i32
  }
  func.func @transform_4(%arg0: i32) -> (i32, i32) {
    %c0_i32 = arith.constant 0 : i32
    %c0_i32_0 = arith.constant 0 : i32
    %c0_i32_1 = arith.constant 0 : i32
    return %c0_i32, %c0_i32_0 : i32, i32
  }
  func.func @transform_5(%arg0: i32) -> (i32, i32) {
    %c0_i32 = arith.constant 0 : i32
    %c0_i32_0 = arith.constant 0 : i32
    %c0_i32_1 = arith.constant 0 : i32
    return %c0_i32, %c0_i32_0 : i32, i32
  }
  func.func @transform_6(%arg0: i32) -> (i32, i32) {
    %c0_i32 = arith.constant 0 : i32
    %c0_i32_0 = arith.constant 0 : i32
    %c0_i32_1 = arith.constant 0 : i32
    return %c0_i32, %c0_i32_0 : i32, i32
  }
  func.func @transform_7(%arg0: i32) -> (i32, i32) {
    %c0_i32 = arith.constant 0 : i32
    %c0_i32_0 = arith.constant 0 : i32
    %c0_i32_1 = arith.constant 0 : i32
    return %c0_i32, %c0_i32_0 : i32, i32
  }
  func.func @transform_8(%arg0: i32) -> (i32, i32) {
    %c0_i32 = arith.constant 0 : i32
    %c0_i32_0 = arith.constant 0 : i32
    %c0_i32_1 = arith.constant 0 : i32
    return %c0_i32, %c0_i32_0 : i32, i32
  }
  func.func @transform_9(%arg0: i32) -> (i32, i32, i32) {
    %c0_i32 = arith.constant 0 : i32
    %c0_i32_0 = arith.constant 0 : i32
    %c0_i32_1 = arith.constant 0 : i32
    return %arg0, %c0_i32, %c0_i32_0 : i32, i32, i32
  }
  func.func @transform_10(%arg0: i32) -> (i32, i32, i32) {
    %c0_i32 = arith.constant 0 : i32
    %c0_i32_0 = arith.constant 0 : i32
    %c0_i32_1 = arith.constant 0 : i32
    return %arg0, %c0_i32, %c0_i32_0 : i32, i32, i32
  }
}

</mosaic_0001>

<llo_original>
// kernel: crowd_density_classifier_forward.1
$region0: #{crowd_density_classifier_forward.1}
  #allocation0 [shape = 'u32[]', space=smem, size = 0x4, offset = 0x4, fixed_abs, tag = 'smem constant byte address 0x4 - core index']
  #allocation1 [shape = 'u32[144,128]{1,0:T(1,128)}', space=vmem, size = 0x12000, scoped, tag = 'internal scratch']
  #allocation2 [shape = 'f32[1]{0:T(128)S(6)}', space=smem, size = 0x200, scoped, tag = 'scoped memory for crowd_density_classifier_forward.1']
  %s0 = inlined_call_operand.vmem [shape: f32[1,4,16,128], index: 0, kind: input, shape index: {}]
  %s1 = inlined_call_operand.vmem [shape: f32[36], index: 1, kind: input, shape index: {}]
  %s2 = inlined_call_operand.<no memory space> [shape: f32[1], index: 2, kind: input, shape index: {}]
  %s3 = inlined_call_operand.vmem [shape: f32[1,64], index: 3, kind: input, shape index: {}]
  %s4 = inlined_call_operand.vmem [shape: f32[1,64], index: 4, kind: input, shape index: {}]
  %s5 = inlined_call_operand.vmem [shape: f32[64,32], index: 5, kind: input, shape index: {}]
  %s6 = inlined_call_operand.vmem [shape: f32[1,32], index: 6, kind: input, shape index: {}]
  %s7 = inlined_call_operand.vmem [shape: f32[32,128], index: 7, kind: input, shape index: {}]
  %s8 = inlined_call_operand.vmem [shape: f32[1,128], index: 8, kind: input, shape index: {}]
  %s9 = inlined_call_operand.vmem [shape: f32[1,16,128], index: 9, kind: output, shape index: {0}]
  %s10 = inlined_call_operand.vmem [shape: f32[1,8,128], index: 10, kind: output, shape index: {1}]
  %11 = xla_tuple %s9, %s10
  %s12 = sld [smem:[#allocation0]]
  $region58: #{crowd_density_classifier_forward.1} parent=0
    _
  %s14 = ssub.s32 1, %s12
  %s15 = scalar_select 0, %s14, %s12
  %16 = sst [smem:[#allocation2]] %s2
  $region1: #{crowd_density_classifier_forward.1} parent=0
    #allocation3 [shape = 'u8[512]{0}', space=smem, size = 0x200, scoped, tag = 'input window, operand 1, single buffered']
    #allocation4 [shape = 's32[1]{0}', space=sflag, size = 0x4, scoped, tag = 'scoped memory for crowd_density_classifier_forward.1']
    %17 = vsyncpa [#allocation4], 0
    // Predicated region
    $region2: #{crowd_density_classifier_forward.1} parent=1 // pred_check
      _
    $region3: #{crowd_density_classifier_forward.1} parent=1 // pred_check_branch
      %19 = sbr.rel (0) target = $region5
    $region4: #{crowd_density_classifier_forward.1} parent=1 // pred_region
      _
    $region5: #{crowd_density_classifier_forward.1} parent=1 // pred_fallthru
      _
    // Predicated region
    $region6: #{crowd_density_classifier_forward.1} parent=1 // pred_check
      _
    $region7: #{crowd_density_classifier_forward.1} parent=1 // pred_check_branch
      %21 = sbr.rel (0) target = $region9
    $region8: #{crowd_density_classifier_forward.1} parent=1 // pred_region
      %s23 = ssub.s32 16, 16
      %24 = vsyncadd [#allocation4], %s23
      %s26 = sshll.u32 %s1, 4
      %s27 = int_to_ptr.vmem [resolvable:$true] %s26
      %29 = dma.vmem_to_smem %s27, 16, [#allocation3], [#allocation4]
    $region9: #{crowd_density_classifier_forward.1} parent=1 // pred_fallthru
      _
    // Predicated region
    $region10: #{crowd_density_classifier_forward.1} parent=1 // pred_check
      _
    $region11: #{crowd_density_classifier_forward.1} parent=1 // pred_check_branch
      %31 = sbr.rel (0) target = $region13
    $region12: #{crowd_density_classifier_forward.1} parent=1 // pred_region
      _
    $region13: #{crowd_density_classifier_forward.1} parent=1 // pred_fallthru
      _
    // Predicated region
    $region14: #{crowd_density_classifier_forward.1} parent=1 // pred_check
      _
    $region15: #{crowd_density_classifier_forward.1} parent=1 // pred_check_branch
      %33 = sbr.rel (0) target = $region17
    $region16: #{crowd_density_classifier_forward.1} parent=1 // pred_region
      _
    $region17: #{crowd_density_classifier_forward.1} parent=1 // pred_fallthru
      _
    // Predicated region
    $region18: #{crowd_density_classifier_forward.1} parent=1 // pred_check
      _
    $region19: #{crowd_density_classifier_forward.1} parent=1 // pred_check_branch
      %35 = sbr.rel (0) target = $region21
    $region20: #{crowd_density_classifier_forward.1} parent=1 // pred_region
      _
    $region21: #{crowd_density_classifier_forward.1} parent=1 // pred_fallthru
      _
    // Predicated region
    $region22: #{crowd_density_classifier_forward.1} parent=1 // pred_check
      _
    $region23: #{crowd_density_classifier_forward.1} parent=1 // pred_check_branch
      %37 = sbr.rel (0) target = $region25
    $region24: #{crowd_density_classifier_forward.1} parent=1 // pred_region
      _
    $region25: #{crowd_density_classifier_forward.1} parent=1 // pred_fallthru
      _
    // Predicated region
    $region26: #{crowd_density_classifier_forward.1} parent=1 // pred_check
      _
    $region27: #{crowd_density_classifier_forward.1} parent=1 // pred_check_branch
      %39 = sbr.rel (0) target = $region29
    $region28: #{crowd_density_classifier_forward.1} parent=1 // pred_region
      _
    $region29: #{crowd_density_classifier_forward.1} parent=1 // pred_fallthru
      _
    // Predicated region
    $region30: #{crowd_density_classifier_forward.1} parent=1 // pred_check
      _
    $region31: #{crowd_density_classifier_forward.1} parent=1 // pred_check_branch
      %41 = sbr.rel (0) target = $region33
    $region32: #{crowd_density_classifier_forward.1} parent=1 // pred_region
      _
    $region33: #{crowd_density_classifier_forward.1} parent=1 // pred_fallthru
      _
    // Predicated region
    $region34: #{crowd_density_classifier_forward.1} parent=1 // pred_check
      _
    $region35: #{crowd_density_classifier_forward.1} parent=1 // pred_check_branch
      %43 = sbr.rel (0) target = $region37
    $region36: #{crowd_density_classifier_forward.1} parent=1 // pred_region
      _
    $region37: #{crowd_density_classifier_forward.1} parent=1 // pred_fallthru
      _
    // Predicated region
    $region38: #{crowd_density_classifier_forward.1} parent=1 // pred_check
      _
    $region39: #{crowd_density_classifier_forward.1} parent=1 // pred_check_branch
      %45 = sbr.rel (0) target = $region41
    $region40: #{crowd_density_classifier_forward.1} parent=1 // pred_region
      %46 = dma.done [#allocation4], 16
    $region41: #{crowd_density_classifier_forward.1} parent=1 // pred_fallthru
      _
    %47 = sfence
    %v48 = vlaneseq
    %v49 = vshrl.u32 %v48, 7
    %v50 = vadd.s32 %v49, 8
    %v51 = vlaneseq
    %v52 = vand.u32 %v51, 127
    %v53 = vand.u32 %v52, 15
    %vm54 = vcmp.ge.s32.totalorder %v49, 1
    %vm55 = vcmp.ge.s32.totalorder %v50, 1
    %vm56 = vcmp.le.s32.totalorder %v49, 14
    %vm57 = vcmp.le.s32.totalorder %v50, 14
    %vm58 = vcmp.ge.s32.totalorder %v53, 1
    %vm59 = vcmp.le.s32.totalorder %v53, 14
    %v60 = vmul.u32 %v49, 16
    %vm61 = vcmp.ge.s32.totalorder %v52, %v60
    %v62 = vadd.s32 %v60, 16
    %vm63 = vcmp.lt.s32.totalorder %v52, %v62
    %vm64 = vmand %vm61, %vm63
    %v65 = vsel %vm64, 1, 0
    %v66 = vcvt.s32.f32 %v65
    %v67 = vld [vmem:[%s0] sm:$0xff]
    %v68 = vld [vmem:[%s0 + $0x8] sm:$0xff]
    %v69 = vrot.slane %v67, 7
    %v70 = vrot.slane %v68, 7
    %vm71 = vcmp.lt.s32.totalorder %v49, 1
    %v72 = vsel %vm71, %v69, %v70
    %v73 = vsel %vm71, %v70, %v69
    %v74 = vsel %vm54, %v73, 0.0
    %v75 = vsel %vm55, %v72, 0.0
    %v76 = vrot.slane %v67, 1
    %v77 = vrot.slane %v68, 1
    %vm78 = vcmp.lt.s32.totalorder %v49, 7
    %v79 = vsel %vm78, %v76, %v77
    %v80 = vsel %vm78, %v77, %v76
    %v81 = vsel %vm56, %v79, 0.0
    %v82 = vsel %vm57, %v80, 0.0
    %83 = vrot.lane.b32.xlu0 %v74, 1
    %v84 = vpop.permute.xlu0 %83
    %85 = vrot.lane.b32.xlu0 %v75, 1
    %v86 = vpop.permute.xlu0 %85
    %v87 = vsel %vm58, %v84, 0.0
    %v88 = vsel %vm58, %v86, 0.0
    %89 = vrot.lane.b32.xlu0 %v74, 127
    %v90 = vpop.permute.xlu0 %89
    %91 = vrot.lane.b32.xlu0 %v75, 127
    %v92 = vpop.permute.xlu0 %91
    %v93 = vsel %vm59, %v90, 0.0
    %v94 = vsel %vm59, %v92, 0.0
    %s95 = sld [smem:[#allocation3]]
    %v96 = vstv %s95
    %v97 = vmul.f32 %v87, %v96
    %v98 = vmul.f32 %v88, %v96
    %v99 = vadd.f32 %v97, 0.0
    %v100 = vadd.f32 %v98, 0.0
    %s101 = sld [smem:[#allocation3 + $0x1]]
    %v102 = vstv %s101
    %v103 = vmul.f32 %v74, %v102
    %v104 = vmul.f32 %v75, %v102
    %v105 = vadd.f32 %v99, %v103
    %v106 = vadd.f32 %v100, %v104
    %s107 = sld [smem:[#allocation3 + $0x2]]
    %v108 = vstv %s107
    %v109 = vmul.f32 %v93, %v108
    %v110 = vmul.f32 %v94, %v108
    %v111 = vadd.f32 %v105, %v109
    %v112 = vadd.f32 %v106, %v110
    %113 = vrot.lane.b32.xlu0 %v67, 1
    %v114 = vpop.permute.xlu0 %113
    %115 = vrot.lane.b32.xlu0 %v68, 1
    %v116 = vpop.permute.xlu0 %115
    %v117 = vsel %vm58, %v114, 0.0
    %v118 = vsel %vm58, %v116, 0.0
    %119 = vrot.lane.b32.xlu0 %v67, 127
    %v120 = vpop.permute.xlu0 %119
    %121 = vrot.lane.b32.xlu0 %v68, 127
    %v122 = vpop.permute.xlu0 %121
    %v123 = vsel %vm59, %v120, 0.0
    %v124 = vsel %vm59, %v122, 0.0
    %s125 = sld [smem:[#allocation3 + $0x3]]
    %v126 = vstv %s125
    %v127 = vmul.f32 %v117, %v126
    %v128 = vmul.f32 %v118, %v126
    %v129 = vadd.f32 %v111, %v127
    %v130 = vadd.f32 %v112, %v128
    %s131 = sld [smem:[#allocation3 + $0x4]]
    %v132 = vstv %s131
    %v133 = vmul.f32 %v67, %v132
    %v134 = vmul.f32 %v68, %v132
    %v135 = vadd.f32 %v129, %v133
    %v136 = vadd.f32 %v130, %v134
    %s137 = sld [smem:[#allocation3 + $0x5]]
    %v138 = vstv %s137
    %v139 = vmul.f32 %v123, %v138
    %v140 = vmul.f32 %v124, %v138
    %v141 = vadd.f32 %v135, %v139
    %v142 = vadd.f32 %v136, %v140
    %143 = vrot.lane.b32.xlu0 %v81, 1
    %v144 = vpop.permute.xlu0 %143
    %145 = vrot.lane.b32.xlu0 %v82, 1
    %v146 = vpop.permute.xlu0 %145
    %v147 = vsel %vm58, %v144, 0.0
    %v148 = vsel %vm58, %v146, 0.0
    %149 = vrot.lane.b32.xlu0 %v81, 127
    %v150 = vpop.permute.xlu0 %149
    %151 = vrot.lane.b32.xlu0 %v82, 127
    %v152 = vpop.permute.xlu0 %151
    %v153 = vsel %vm59, %v150, 0.0
    %v154 = vsel %vm59, %v152, 0.0
    %s155 = sld [smem:[#allocation3 + $0x6]]
    %v156 = vstv %s155
    %v157 = vmul.f32 %v147, %v156
    %v158 = vmul.f32 %v148, %v156
    %v159 = vadd.f32 %v141, %v157
    %v160 = vadd.f32 %v142, %v158
    %s161 = sld [smem:[#allocation3 + $0x7]]
    %v162 = vstv %s161
    %v163 = vmul.f32 %v81, %v162
    %v164 = vmul.f32 %v82, %v162
    %v165 = vadd.f32 %v159, %v163
    %v166 = vadd.f32 %v160, %v164
    %s167 = sld [smem:[#allocation3 + $0x8]]
    %v168 = vstv %s167
    %v169 = vmul.f32 %v153, %v168
    %v170 = vmul.f32 %v154, %v168
    %v171 = vadd.f32 %v165, %v169
    %v172 = vadd.f32 %v166, %v170
    %s173 = scalar_lea.vmem %s0, 16
    %v174 = vld [vmem:[%s173] sm:$0xff]
    %v175 = vld [vmem:[%s173 + $0x8] sm:$0xff]
    %v176 = vrot.slane %v174, 7
    %v177 = vrot.slane %v175, 7
    %v178 = vsel %vm71, %v176, %v177
    %v179 = vsel %vm71, %v177, %v176
    %v180 = vsel %vm54, %v179, 0.0
    %v181 = vsel %vm55, %v178, 0.0
    %v182 = vrot.slane %v174, 1
    %v183 = vrot.slane %v175, 1
    %v184 = vsel %vm78, %v182, %v183
    %v185 = vsel %vm78, %v183, %v182
    %v186 = vsel %vm56, %v184, 0.0
    %v187 = vsel %vm57, %v185, 0.0
    %188 = vrot.lane.b32.xlu0 %v180, 1
    %v189 = vpop.permute.xlu0 %188
    %190 = vrot.lane.b32.xlu0 %v181, 1
    %v191 = vpop.permute.xlu0 %190
    %v192 = vsel %vm58, %v189, 0.0
    %v193 = vsel %vm58, %v191, 0.0
    %194 = vrot.lane.b32.xlu0 %v180, 127
    %v195 = vpop.permute.xlu0 %194
    %196 = vrot.lane.b32.xlu0 %v181, 127
    %v197 = vpop.permute.xlu0 %196
    %v198 = vsel %vm59, %v195, 0.0
    %v199 = vsel %vm59, %v197, 0.0
    %s200 = sld [smem:[#allocation3 + $0x9]]
    %v201 = vstv %s200
    %v202 = vmul.f32 %v192, %v201
    %v203 = vmul.f32 %v193, %v201
    %v204 = vadd.f32 %v171, %v202
    %v205 = vadd.f32 %v172, %v203
    %s206 = sld [smem:[#allocation3 + $0xa]]
    %v207 = vstv %s206
    %v208 = vmul.f32 %v180, %v207
    %v209 = vmul.f32 %v181, %v207
    %v210 = vadd.f32 %v204, %v208
    %v211 = vadd.f32 %v205, %v209
    %s212 = sld [smem:[#allocation3 + $0xb]]
    %v213 = vstv %s212
    %v214 = vmul.f32 %v198, %v213
    %v215 = vmul.f32 %v199, %v213
    %v216 = vadd.f32 %v210, %v214
    %v217 = vadd.f32 %v211, %v215
    %218 = vrot.lane.b32.xlu0 %v174, 1
    %v219 = vpop.permute.xlu0 %218
    %220 = vrot.lane.b32.xlu0 %v175, 1
    %v221 = vpop.permute.xlu0 %220
    %v222 = vsel %vm58, %v219, 0.0
    %v223 = vsel %vm58, %v221, 0.0
    %224 = vrot.lane.b32.xlu0 %v174, 127
    %v225 = vpop.permute.xlu0 %224
    %226 = vrot.lane.b32.xlu0 %v175, 127
    %v227 = vpop.permute.xlu0 %226
    %v228 = vsel %vm59, %v225, 0.0
    %v229 = vsel %vm59, %v227, 0.0
    %s230 = sld [smem:[#allocation3 + $0xc]]
    %v231 = vstv %s230
    %v232 = vmul.f32 %v222, %v231
    %v233 = vmul.f32 %v223, %v231
    %v234 = vadd.f32 %v216, %v232
    %v235 = vadd.f32 %v217, %v233
    %s236 = sld [smem:[#allocation3 + $0xd]]
    %v237 = vstv %s236
    %v238 = vmul.f32 %v174, %v237
    %v239 = vmul.f32 %v175, %v237
    %v240 = vadd.f32 %v234, %v238
    %v241 = vadd.f32 %v235, %v239
    %s242 = sld [smem:[#allocation3 + $0xe]]
    %v243 = vstv %s242
    %v244 = vmul.f32 %v228, %v243
    %v245 = vmul.f32 %v229, %v243
    %v246 = vadd.f32 %v240, %v244
    %v247 = vadd.f32 %v241, %v245
    %248 = vrot.lane.b32.xlu0 %v186, 1
    %v249 = vpop.permute.xlu0 %248
    %250 = vrot.lane.b32.xlu0 %v187, 1
    %v251 = vpop.permute.xlu0 %250
    %v252 = vsel %vm58, %v249, 0.0
    %v253 = vsel %vm58, %v251, 0.0
    %254 = vrot.lane.b32.xlu0 %v186, 127
    %v255 = vpop.permute.xlu0 %254
    %256 = vrot.lane.b32.xlu0 %v187, 127
    %v257 = vpop.permute.xlu0 %256
    %v258 = vsel %vm59, %v255, 0.0
    %v259 = vsel %vm59, %v257, 0.0
    %s260 = sld [smem:[#allocation3 + $0xf]]
    %v261 = vstv %s260
    %v262 = vmul.f32 %v252, %v261
    %v263 = vmul.f32 %v253, %v261
    %v264 = vadd.f32 %v246, %v262
    %v265 = vadd.f32 %v247, %v263
    %s266 = sld [smem:[#allocation3 + $0x10]]
    %v267 = vstv %s266
    %v268 = vmul.f32 %v186, %v267
    %v269 = vmul.f32 %v187, %v267
    %v270 = vadd.f32 %v264, %v268
    %v271 = vadd.f32 %v265, %v269
    %s272 = sld [smem:[#allocation3 + $0x11]]
    %v273 = vstv %s272
    %v274 = vmul.f32 %v258, %v273
    %v275 = vmul.f32 %v259, %v273
    %v276 = vadd.f32 %v270, %v274
    %v277 = vadd.f32 %v271, %v275
    %s278 = scalar_lea.vmem %s0, 32
    %v279 = vld [vmem:[%s278] sm:$0xff]
    %v280 = vld [vmem:[%s278 + $0x8] sm:$0xff]
    %v281 = vrot.slane %v279, 7
    %v282 = vrot.slane %v280, 7
    %v283 = vsel %vm71, %v281, %v282
    %v284 = vsel %vm71, %v282, %v281
    %v285 = vsel %vm54, %v284, 0.0
    %v286 = vsel %vm55, %v283, 0.0
    %v287 = vrot.slane %v279, 1
    %v288 = vrot.slane %v280, 1
    %v289 = vsel %vm78, %v287, %v288
    %v290 = vsel %vm78, %v288, %v287
    %v291 = vsel %vm56, %v289, 0.0
    %v292 = vsel %vm57, %v290, 0.0
    %293 = vrot.lane.b32.xlu0 %v285, 1
    %v294 = vpop.permute.xlu0 %293
    %295 = vrot.lane.b32.xlu0 %v286, 1
    %v296 = vpop.permute.xlu0 %295
    %v297 = vsel %vm58, %v294, 0.0
    %v298 = vsel %vm58, %v296, 0.0
    %299 = vrot.lane.b32.xlu0 %v285, 127
    %v300 = vpop.permute.xlu0 %299
    %301 = vrot.lane.b32.xlu0 %v286, 127
    %v302 = vpop.permute.xlu0 %301
    %v303 = vsel %vm59, %v300, 0.0
    %v304 = vsel %vm59, %v302, 0.0
    %s305 = sld [smem:[#allocation3 + $0x12]]
    %v306 = vstv %s305
    %v307 = vmul.f32 %v297, %v306
    %v308 = vmul.f32 %v298, %v306
    %v309 = vadd.f32 %v276, %v307
    %v310 = vadd.f32 %v277, %v308
    %s311 = sld [smem:[#allocation3 + $0x13]]
    %v312 = vstv %s311
    %v313 = vmul.f32 %v285, %v312
    %v314 = vmul.f32 %v286, %v312
    %v315 = vadd.f32 %v309, %v313
    %v316 = vadd.f32 %v310, %v314
    %s317 = sld [smem:[#allocation3 + $0x14]]
    %v318 = vstv %s317
    %v319 = vmul.f32 %v303, %v318
    %v320 = vmul.f32 %v304, %v318
    %v321 = vadd.f32 %v315, %v319
    %v322 = vadd.f32 %v316, %v320
    %323 = vrot.lane.b32.xlu0 %v279, 1
    %v324 = vpop.permute.xlu0 %323
    %325 = vrot.lane.b32.xlu0 %v280, 1
    %v326 = vpop.permute.xlu0 %325
    %v327 = vsel %vm58, %v324, 0.0
    %v328 = vsel %vm58, %v326, 0.0
    %329 = vrot.lane.b32.xlu0 %v279, 127
    %v330 = vpop.permute.xlu0 %329
    %331 = vrot.lane.b32.xlu0 %v280, 127
    %v332 = vpop.permute.xlu0 %331
    %v333 = vsel %vm59, %v330, 0.0
    %v334 = vsel %vm59, %v332, 0.0
    %s335 = sld [smem:[#allocation3 + $0x15]]
    %v336 = vstv %s335
    %v337 = vmul.f32 %v327, %v336
    %v338 = vmul.f32 %v328, %v336
    %v339 = vadd.f32 %v321, %v337
    %v340 = vadd.f32 %v322, %v338
    %s341 = sld [smem:[#allocation3 + $0x16]]
    %v342 = vstv %s341
    %v343 = vmul.f32 %v279, %v342
    %v344 = vmul.f32 %v280, %v342
    %v345 = vadd.f32 %v339, %v343
    %v346 = vadd.f32 %v340, %v344
    %s347 = sld [smem:[#allocation3 + $0x17]]
    %v348 = vstv %s347
    %v349 = vmul.f32 %v333, %v348
    %v350 = vmul.f32 %v334, %v348
    %v351 = vadd.f32 %v345, %v349
    %v352 = vadd.f32 %v346, %v350
    %353 = vrot.lane.b32.xlu0 %v291, 1
    %v354 = vpop.permute.xlu0 %353
    %355 = vrot.lane.b32.xlu0 %v292, 1
    %v356 = vpop.permute.xlu0 %355
    %v357 = vsel %vm58, %v354, 0.0
    %v358 = vsel %vm58, %v356, 0.0
    %359 = vrot.lane.b32.xlu0 %v291, 127
    %v360 = vpop.permute.xlu0 %359
    %361 = vrot.lane.b32.xlu0 %v292, 127
    %v362 = vpop.permute.xlu0 %361
    %v363 = vsel %vm59, %v360, 0.0
    %v364 = vsel %vm59, %v362, 0.0
    %s365 = sld [smem:[#allocation3 + $0x18]]
    %v366 = vstv %s365
    %v367 = vmul.f32 %v357, %v366
    %v368 = vmul.f32 %v358, %v366
    %v369 = vadd.f32 %v351, %v367
    %v370 = vadd.f32 %v352, %v368
    %s371 = sld [smem:[#allocation3 + $0x19]]
    %v372 = vstv %s371
    %v373 = vmul.f32 %v291, %v372
    %v374 = vmul.f32 %v292, %v372
    %v375 = vadd.f32 %v369, %v373
    %v376 = vadd.f32 %v370, %v374
    %s377 = sld [smem:[#allocation3 + $0x1a]]
    %v378 = vstv %s377
    %v379 = vmul.f32 %v363, %v378
    %v380 = vmul.f32 %v364, %v378
    %v381 = vadd.f32 %v375, %v379
    %v382 = vadd.f32 %v376, %v380
    %s383 = scalar_lea.vmem %s0, 48
    %v384 = vld [vmem:[%s383] sm:$0xff]
    %v385 = vld [vmem:[%s383 + $0x8] sm:$0xff]
    %v386 = vrot.slane %v384, 7
    %v387 = vrot.slane %v385, 7
    %v388 = vsel %vm71, %v386, %v387
    %v389 = vsel %vm71, %v387, %v386
    %v390 = vsel %vm54, %v389, 0.0
    %v391 = vsel %vm55, %v388, 0.0
    %v392 = vrot.slane %v384, 1
    %v393 = vrot.slane %v385, 1
    %v394 = vsel %vm78, %v392, %v393
    %v395 = vsel %vm78, %v393, %v392
    %v396 = vsel %vm56, %v394, 0.0
    %v397 = vsel %vm57, %v395, 0.0
    %398 = vrot.lane.b32.xlu0 %v390, 1
    %v399 = vpop.permute.xlu0 %398
    %400 = vrot.lane.b32.xlu0 %v391, 1
    %v401 = vpop.permute.xlu0 %400
    %v402 = vsel %vm58, %v399, 0.0
    %v403 = vsel %vm58, %v401, 0.0
    %404 = vrot.lane.b32.xlu0 %v390, 127
    %v405 = vpop.permute.xlu0 %404
    %406 = vrot.lane.b32.xlu0 %v391, 127
    %v407 = vpop.permute.xlu0 %406
    %v408 = vsel %vm59, %v405, 0.0
    %v409 = vsel %vm59, %v407, 0.0
    %s410 = sld [smem:[#allocation3 + $0x1b]]
    %v411 = vstv %s410
    %v412 = vmul.f32 %v402, %v411
    %v413 = vmul.f32 %v403, %v411
    %v414 = vadd.f32 %v381, %v412
    %v415 = vadd.f32 %v382, %v413
    %s416 = sld [smem:[#allocation3 + $0x1c]]
    %v417 = vstv %s416
    %v418 = vmul.f32 %v390, %v417
    %v419 = vmul.f32 %v391, %v417
    %v420 = vadd.f32 %v414, %v418
    %v421 = vadd.f32 %v415, %v419
    %s422 = sld [smem:[#allocation3 + $0x1d]]
    %v423 = vstv %s422
    %v424 = vmul.f32 %v408, %v423
    %v425 = vmul.f32 %v409, %v423
    %v426 = vadd.f32 %v420, %v424
    %v427 = vadd.f32 %v421, %v425
    %428 = vrot.lane.b32.xlu0 %v384, 1
    %v429 = vpop.permute.xlu0 %428
    %430 = vrot.lane.b32.xlu0 %v385, 1
    %v431 = vpop.permute.xlu0 %430
    %v432 = vsel %vm58, %v429, 0.0
    %v433 = vsel %vm58, %v431, 0.0
    %434 = vrot.lane.b32.xlu0 %v384, 127
    %v435 = vpop.permute.xlu0 %434
    %436 = vrot.lane.b32.xlu0 %v385, 127
    %v437 = vpop.permute.xlu0 %436
    %v438 = vsel %vm59, %v435, 0.0
    %v439 = vsel %vm59, %v437, 0.0
    %s440 = sld [smem:[#allocation3 + $0x1e]]
    %v441 = vstv %s440
    %v442 = vmul.f32 %v432, %v441
    %v443 = vmul.f32 %v433, %v441
    %v444 = vadd.f32 %v426, %v442
    %v445 = vadd.f32 %v427, %v443
    %s446 = sld [smem:[#allocation3 + $0x1f]]
    %v447 = vstv %s446
    %v448 = vmul.f32 %v384, %v447
    %v449 = vmul.f32 %v385, %v447
    %v450 = vadd.f32 %v444, %v448
    %v451 = vadd.f32 %v445, %v449
    %s452 = sld [smem:[#allocation3 + $0x20]]
    %v453 = vstv %s452
    %v454 = vmul.f32 %v438, %v453
    %v455 = vmul.f32 %v439, %v453
    %v456 = vadd.f32 %v450, %v454
    %v457 = vadd.f32 %v451, %v455
    %458 = vrot.lane.b32.xlu0 %v396, 1
    %v459 = vpop.permute.xlu0 %458
    %460 = vrot.lane.b32.xlu0 %v397, 1
    %v461 = vpop.permute.xlu0 %460
    %v462 = vsel %vm58, %v459, 0.0
    %v463 = vsel %vm58, %v461, 0.0
    %464 = vrot.lane.b32.xlu0 %v396, 127
    %v465 = vpop.permute.xlu0 %464
    %466 = vrot.lane.b32.xlu0 %v397, 127
    %v467 = vpop.permute.xlu0 %466
    %v468 = vsel %vm59, %v465, 0.0
    %v469 = vsel %vm59, %v467, 0.0
    %s470 = sld [smem:[#allocation3 + $0x21]]
    %v471 = vstv %s470
    %v472 = vmul.f32 %v462, %v471
    %v473 = vmul.f32 %v463, %v471
    %v474 = vadd.f32 %v456, %v472
    %v475 = vadd.f32 %v457, %v473
    %s476 = sld [smem:[#allocation3 + $0x22]]
    %v477 = vstv %s476
    %v478 = vmul.f32 %v396, %v477
    %v479 = vmul.f32 %v397, %v477
    %v480 = vadd.f32 %v474, %v478
    %v481 = vadd.f32 %v475, %v479
    %s482 = sld [smem:[#allocation3 + $0x23]]
    %v483 = vstv %s482
    %v484 = vmul.f32 %v468, %v483
    %v485 = vmul.f32 %v469, %v483
    %v486 = vadd.f32 %v480, %v484
    %v487 = vadd.f32 %v481, %v485
    %s488 = sld [smem:[#allocation2]]
    %v489 = vstv %s488
    %v490 = vadd.f32 %v486, %v489
    %v491 = vadd.f32 %v487, %v489
    %492 = vst [vmem:[%s9] sm:$0xff] %v490
    %493 = vst [vmem:[%s9 + $0x8] sm:$0xff] %v491
    %v494 = vadd.f32 %v490, %v491
    %v495 = vrot.slane %v494, 4
    %v496 = vadd.f32 %v494, %v495
    %v497 = vrot.slane %v496, 2
    %v498 = vadd.f32 %v496, %v497
    %v499 = vrot.slane %v498, 1
    %v500 = vadd.f32 %v498, %v499
    %v501 = vmul.f32 %v66, %v500
    %502 = vadd.xlane.f32.xlu0 %v501
    %v503 = vpop.xlane.xlu0 %502
    %v504 = vmul.f32 %v503, 0.00390625
    %v505 = vld [vmem:[%s3] sm:$0x1]
    %v507 = vlaneseq
    %v508 = vshrl.u32 %v507, 7
    %v509 = vsub.s32 0, %v508
    %v510 = vrot.slane %v505, %v509
    %v512 = vmul.f32 %v504, %v510
    %v513 = vld [vmem:[%s4] sm:$0x1]
    %v515 = vlaneseq
    %v516 = vshrl.u32 %v515, 7
    %v517 = vsub.s32 0, %v516
    %v518 = vrot.slane %v513, %v517
    %v520 = vadd.f32 %v512, %v518
    %v521 = vmax.f32 %v520, 0.0
    %v522 = vld [vmem:[%s5] sm:$0xff]
    %v523 = vld [vmem:[%s5 + $0x8] sm:$0xff]
    %v524 = vld [vmem:[%s5 + $0x10] sm:$0xff]
    %v525 = vld [vmem:[%s5 + $0x18] sm:$0xff]
    %v526 = vld [vmem:[%s5 + $0x20] sm:$0xff]
    %v527 = vld [vmem:[%s5 + $0x28] sm:$0xff]
    %v528 = vld [vmem:[%s5 + $0x30] sm:$0xff]
    %v529 = vld [vmem:[%s5 + $0x38] sm:$0xff]
    %v530 = vld [vmem:[%s6] sm:$0x1]
    %v532 = vlaneseq
    %v533 = vshrl.u32 %v532, 7
    %v534 = vsub.s32 0, %v533
    %v535 = vrot.slane %v530, %v534
    %vm537 = vcmask 523264
    %v539 = vsel %vm537, %v521, 0
    %541 = vmatprep.subr.mxu0 0.0
    %542 = vmatpush1.msra.mxu0 %v522
    %543 = vmatprep.subr.mxu0 0.0
    %544 = vmatpush1.msra.mxu0 %v523
    %545 = vmatprep.subr.mxu0 0.0
    %546 = vmatpush1.msra.mxu0 %v524
    %547 = vmatprep.subr.mxu0 0.0
    %548 = vmatpush1.msra.mxu0 %v525
    %549 = vmatprep.subr.mxu0 0.0
    %550 = vmatpush1.msra.mxu0 %v526
    %551 = vmatprep.subr.mxu0 0.0
    %552 = vmatpush1.msra.mxu0 %v527
    %553 = vmatprep.subr.mxu0 0.0
    %554 = vmatpush1.msra.mxu0 %v528
    %555 = vmatprep.subr.mxu0 0.0
    %556 = vmatpush1.msra.mxu0 %v529
    %557 = vmatprep.subr.mxu0 0.0
    %558 = vmatpush1.msra.mxu0 0.0
    %559 = vmatprep.subr.mxu0 0.0
    %560 = vmatpush1.msra.mxu0 0.0
    %561 = vmatprep.subr.mxu0 0.0
    %562 = vmatpush1.msra.mxu0 0.0
    %563 = vmatprep.subr.mxu0 0.0
    %564 = vmatpush1.msra.mxu0 0.0
    %565 = vmatprep.subr.mxu0 0.0
    %566 = vmatpush1.msra.mxu0 0.0
    %567 = vmatprep.subr.mxu0 0.0
    %568 = vmatpush1.msra.mxu0 0.0
    %569 = vmatprep.subr.mxu0 0.0
    %570 = vmatpush1.msra.mxu0 0.0
    %571 = vmatprep.subr.mxu0 0.0
    %572 = vmatpush1.msra.mxu0 0.0
    %573 = vmatprep.subr.mxu0 0.0
    %574 = vmatpush1.msra.mxu0 0.0
    %575 = vmatprep.subr.mxu0 0.0
    %576 = vmatpush1.msra.mxu0 0.0
    %577 = vmatprep.subr.mxu0 0.0
    %578 = vmatpush1.msra.mxu0 0.0
    %579 = vmatprep.subr.mxu0 0.0
    %580 = vmatpush1.msra.mxu0 0.0
    %581 = vmatprep.subr.mxu0 0.0
    %582 = vmatpush1.msra.mxu0 0.0
    %583 = vmatprep.subr.mxu0 0.0
    %584 = vmatpush1.msra.mxu0 0.0
    %585 = vmatprep.subr.mxu0 0.0
    %586 = vmatpush1.msra.mxu0 0.0
    %587 = vmatprep.subr.mxu0 0.0
    %588 = vmatpush1.msra.mxu0 0.0
    %589 = vmatprep.subr.mxu0 0.0
    %590 = vmatpush1.msra.mxu0 0.0
    %591 = vmatprep.subr.mxu0 0.0
    %592 = vmatpush1.msra.mxu0 0.0
    %593 = vmatprep.subr.mxu0 0.0
    %594 = vmatpush1.msra.mxu0 0.0
    %595 = vmatprep.subr.mxu0 0.0
    %596 = vmatpush1.msra.mxu0 0.0
    %597 = vmatprep.subr.mxu0 0.0
    %598 = vmatpush1.msra.mxu0 0.0
    %599 = vmatprep.subr.mxu0 0.0
    %600 = vmatpush1.msra.mxu0 0.0
    %601 = vmatprep.subr.mxu0 0.0
    %602 = vmatpush1.msra.mxu0 0.0
    %603 = vmatprep.subr.mxu0 0.0
    %604 = vmatpush1.msra.mxu0 0.0
    %605 = vmatprep.mubr.f32.mxu0 0.0
    %606 = vmatmul.mubr.f32.gmra.mrb[0].mxu0 %v539
    %v607 = vpop.f32.mrb[0].mxu0
    %v608 = vadd.f32 %v535, %v607
    %v609 = vpop.f32.mrb[0].mxu0
    %610 = vdwg.mxu0
    %v611 = vmax.f32 %v608, 0.0
    %v612 = vld [vmem:[%s7] sm:$0xff]
    %v613 = vld [vmem:[%s7 + $0x8] sm:$0xff]
    %v614 = vld [vmem:[%s7 + $0x10] sm:$0xff]
    %v615 = vld [vmem:[%s7 + $0x18] sm:$0xff]
    %v616 = vld [vmem:[%s8] sm:$0x1]
    %v618 = vlaneseq
    %v619 = vshrl.u32 %v618, 7
    %v620 = vsub.s32 0, %v619
    %v621 = vrot.slane %v616, %v620
    %vm623 = vcmask 261120
    %v625 = vsel %vm623, %v611, 0
    %627 = vmatprep.subr.mxu0 0.0
    %628 = vmatpush1.msra.mxu0 %v612
    %629 = vmatprep.subr.mxu0 0.0
    %630 = vmatpush1.msra.mxu0 %v613
    %631 = vmatprep.subr.mxu0 0.0
    %632 = vmatpush1.msra.mxu0 %v614
    %633 = vmatprep.subr.mxu0 0.0
    %634 = vmatpush1.msra.mxu0 %v615
    %635 = vmatprep.subr.mxu0 0.0
    %636 = vmatpush1.msra.mxu0 0.0
    %637 = vmatprep.subr.mxu0 0.0
    %638 = vmatpush1.msra.mxu0 0.0
    %639 = vmatprep.subr.mxu0 0.0
    %640 = vmatpush1.msra.mxu0 0.0
    %641 = vmatprep.subr.mxu0 0.0
    %642 = vmatpush1.msra.mxu0 0.0
    %643 = vmatprep.subr.mxu0 0.0
    %644 = vmatpush1.msra.mxu0 0.0
    %645 = vmatprep.subr.mxu0 0.0
    %646 = vmatpush1.msra.mxu0 0.0
    %647 = vmatprep.subr.mxu0 0.0
    %648 = vmatpush1.msra.mxu0 0.0
    %649 = vmatprep.subr.mxu0 0.0
    %650 = vmatpush1.msra.mxu0 0.0
    %651 = vmatprep.subr.mxu0 0.0
    %652 = vmatpush1.msra.mxu0 0.0
    %653 = vmatprep.subr.mxu0 0.0
    %654 = vmatpush1.msra.mxu0 0.0
    %655 = vmatprep.subr.mxu0 0.0
    %656 = vmatpush1.msra.mxu0 0.0
    %657 = vmatprep.subr.mxu0 0.0
    %658 = vmatpush1.msra.mxu0 0.0
    %659 = vmatprep.subr.mxu0 0.0
    %660 = vmatpush1.msra.mxu0 0.0
    %661 = vmatprep.subr.mxu0 0.0
    %662 = vmatpush1.msra.mxu0 0.0
    %663 = vmatprep.subr.mxu0 0.0
    %664 = vmatpush1.msra.mxu0 0.0
    %665 = vmatprep.subr.mxu0 0.0
    %666 = vmatpush1.msra.mxu0 0.0
    %667 = vmatprep.subr.mxu0 0.0
    %668 = vmatpush1.msra.mxu0 0.0
    %669 = vmatprep.subr.mxu0 0.0
    %670 = vmatpush1.msra.mxu0 0.0
    %671 = vmatprep.subr.mxu0 0.0
    %672 = vmatpush1.msra.mxu0 0.0
    %673 = vmatprep.subr.mxu0 0.0
    %674 = vmatpush1.msra.mxu0 0.0
    %675 = vmatprep.subr.mxu0 0.0
    %676 = vmatpush1.msra.mxu0 0.0
    %677 = vmatprep.subr.mxu0 0.0
    %678 = vmatpush1.msra.mxu0 0.0
    %679 = vmatprep.subr.mxu0 0.0
    %680 = vmatpush1.msra.mxu0 0.0
    %681 = vmatprep.subr.mxu0 0.0
    %682 = vmatpush1.msra.mxu0 0.0
    %683 = vmatprep.subr.mxu0 0.0
    %684 = vmatpush1.msra.mxu0 0.0
    %685 = vmatprep.subr.mxu0 0.0
    %686 = vmatpush1.msra.mxu0 0.0
    %687 = vmatprep.subr.mxu0 0.0
    %688 = vmatpush1.msra.mxu0 0.0
    %689 = vmatprep.subr.mxu0 0.0
    %690 = vmatpush1.msra.mxu0 0.0
    %691 = vmatprep.mubr.f32.mxu0 0.0
    %692 = vmatmul.mubr.f32.gmra.mrb[0].mxu0 %v625
    %v693 = vpop.f32.mrb[0].mxu0
    %v694 = vadd.f32 %v621, %v693
    %v695 = vpop.f32.mrb[0].mxu0
    %696 = vdwg.mxu0
    %697 = vmax.xlane.f32.xlu0 %v694
    %v698 = vpop.xlane.xlu0 %697
    %v699 = vsub.f32 %v694, %v698
    %v700 = vmul.f32 %v699, 1.442695
    %v701 = vpow.pop %v700
    %702 = vadd.xlane.f32.xlu0 %v701
    %v703 = vpop.xlane.xlu0 %702
    %v704 = vrcp.pop %v703
    %v705 = vmul.f32 %v701, %v704
    %706 = vst [vmem:[%s10] sm:$0xff] %v705
    // Predicated region
    $region42: #{crowd_density_classifier_forward.1} parent=1 // pred_check
      _
    $region43: #{crowd_density_classifier_forward.1} parent=1 // pred_check_branch
      %708 = sbr.rel (0) target = $region45
    $region44: #{crowd_density_classifier_forward.1} parent=1 // pred_region
      _
    $region45: #{crowd_density_classifier_forward.1} parent=1 // pred_fallthru
      _
    // Predicated region
    $region46: #{crowd_density_classifier_forward.1} parent=1 // pred_check
      _
    $region47: #{crowd_density_classifier_forward.1} parent=1 // pred_check_branch
      %710 = sbr.rel (0) target = $region49
    $region48: #{crowd_density_classifier_forward.1} parent=1 // pred_region
      _
    $region49: #{crowd_density_classifier_forward.1} parent=1 // pred_fallthru
      _
    // Predicated region
    $region50: #{crowd_density_classifier_forward.1} parent=1 // pred_check
      _
    $region51: #{crowd_density_classifier_forward.1} parent=1 // pred_check_branch
      %712 = sbr.rel (0) target = $region53
    $region52: #{crowd_density_classifier_forward.1} parent=1 // pred_region
      _
    $region53: #{crowd_density_classifier_forward.1} parent=1 // pred_fallthru
      _
    // Predicated region
    $region54: #{crowd_density_classifier_forward.1} parent=1 // pred_check
      _
    $region55: #{crowd_density_classifier_forward.1} parent=1 // pred_check_branch
      %714 = sbr.rel (0) target = $region57
    $region56: #{crowd_density_classifier_forward.1} parent=1 // pred_region
      _
    $region57: #{crowd_density_classifier_forward.1} parent=1 // pred_fallthru
      _
    %715 = vsyncpa [#allocation4], 1

</llo_original>
